<compile_context>
chip_gen: v6e
topology: v6e:2x2x1
jax: 0.10.0
libtpu: 0.0.40
codegen_flags: <defaults>
</compile_context>

<pallas_src>
import functools

import jax
import jax.numpy as jnp
from jax.experimental import pallas as pl
from jax.experimental.pallas import tpu as pltpu

LANE = 64  # padded layer width; real hidden/output widths (50, 10) fit in 64 lanes


def _round_up(x, m):
    return (x + m - 1) // m * m


def mlp_kernel(x_ref, w0_ref, w_ref, b_ref, out_ref):
    """Fused forward pass for one batch tile.

    x_ref  : (TB, D_in)          input tile (f32)
    w0_ref : (D_in, LANE)        layer-0 weight, transposed + zero-padded (bf16)
    w_ref  : (L-1, LANE, LANE)   layers 1..L-1, transposed + zero-padded (bf16)
    b_ref  : (L, 1, LANE)        all biases, zero-padded (f32)
    out_ref: (TB, out_dim)
    """
    n_rest = w_ref.shape[0]          # layers after layer 0 (7 hidden + output)
    out_dim = out_ref.shape[1]
    compute_dtype = w0_ref.dtype     # bf16 by default (f32 if packed that way)

    bias = b_ref[...]                # hoisted once: (L, 1, LANE), f32

    # Layer 0: (TB, D_in) @ (D_in, LANE) -> (TB, LANE); padding lanes stay zero.
    h = jnp.dot(x_ref[...].astype(compute_dtype), w0_ref[...],
                preferred_element_type=jnp.float32)
    h = jnp.maximum(h + bias[0], 0.0)

    # Layers 1..L-1: single 64-lane MXU pass each, bf16 inputs, f32 accumulation.
    for i in range(n_rest):
        h = jnp.dot(h.astype(compute_dtype), w_ref[i],
                    preferred_element_type=jnp.float32)
        h = h + bias[i + 1]
        if i < n_rest - 1:           # ReLU on every layer except the last
            h = jnp.maximum(h, 0.0)

    # out_dim=10 wide store: single masked vreg store, negligible at this size.
    out_ref[...] = h[:, :out_dim].astype(out_ref.dtype)


def pack_params(weights, biases, param_dtype=jnp.bfloat16, lane=LANE):
    """One-time packing of PyTorch-convention params into lane-aligned slabs.

    weights[i]: (out_i, in_i), biases[i]: (out_i,).
    Returns (w0_packed, w_rest_packed, bias_packed).  Run ONCE at init; this is
    deliberately kept out of the per-call forward path.
    """
    assert all(w.shape[0] <= lane for w in weights), "layer width must fit padding"
    assert all(w.shape[1] <= lane for w in weights[1:]), "fan-in must fit padding"
    d_in = weights[0].shape[1]
    h0 = weights[0].shape[0]

    # Layer 0: transpose to (D_in, out) and zero-pad out-dim to `lane`.
    w0p = jnp.zeros((d_in, lane), param_dtype)
    w0p = w0p.at[:, :h0].set(jnp.transpose(weights[0]).astype(param_dtype))

    # Layers 1..L-1: each transposed weight zero-padded into a (lane, lane) block.
    blocks = []
    for w in weights[1:]:
        o, i = w.shape
        blk = jnp.zeros((lane, lane), param_dtype)
        blk = blk.at[:i, :o].set(jnp.transpose(w).astype(param_dtype))
        blocks.append(blk)
    wslab = jnp.stack(blocks, axis=0)                  # (L-1, lane, lane)

    # All biases in one small f32 slab (biases/activations stay f32).
    brows = []
    for b in biases:
        row = jnp.zeros((1, lane), jnp.float32)
        brows.append(row.at[:, :b.shape[0]].set(b.astype(jnp.float32).reshape(1, -1)))
    bslab = jnp.stack(brows, axis=0)                   # (L, 1, lane)

    return w0p, wslab, bslab


@functools.partial(jax.jit, static_argnames=("out_dim",))
def mlp_forward(x, w0_packed, w_rest_packed, bias_packed, out_dim):
    """Per-call path: one fused pallas_call with a micro-batch grid.

    Weights/biases use constant index_maps so they are DMA'd once and stay
    VMEM-resident across grid steps; the batch axis is marked "parallel".
    """
    batch, d_in = x.shape
    lane = w0_packed.shape[1]
    n_rest = w_rest_packed.shape[0]

    # Batch tile: up to 128 rows per MXU pass, always a multiple of 8 sublanes.
    tb = min(128, _round_up(batch, 8))
    padded = _round_up(batch, tb)
    if padded != batch:
        x = jnp.pad(x, ((0, padded - batch), (0, 0)))
    grid = (padded // tb,)

    flops = 2 * padded * (d_in * lane + n_rest * lane * lane)
    bytes_accessed = (
        padded * d_in * x.dtype.itemsize
        + w0_packed.size * w0_packed.dtype.itemsize
        + w_rest_packed.size * w_rest_packed.dtype.itemsize
        + bias_packed.size * bias_packed.dtype.itemsize
        + padded * out_dim * x.dtype.itemsize)

    out = pl.pallas_call(
        mlp_kernel,
        out_shape=jax.ShapeDtypeStruct((padded, out_dim), x.dtype),
        grid=grid,
        in_specs=[
            pl.BlockSpec((tb, d_in), lambda i: (i, 0)),
            pl.BlockSpec(w0_packed.shape, lambda i: (0, 0)),          # resident
            pl.BlockSpec(w_rest_packed.shape, lambda i: (0, 0, 0)),   # resident
            pl.BlockSpec(bias_packed.shape, lambda i: (0, 0, 0)),     # resident
        ],
        out_specs=pl.BlockSpec((tb, out_dim), lambda i: (i, 0)),
        compiler_params=pltpu.CompilerParams(
            dimension_semantics=("parallel",)),
        cost_estimate=pl.CostEstimate(
            flops=flops, transcendentals=0, bytes_accessed=bytes_accessed),
    )(x, w0_packed, w_rest_packed, bias_packed)

    if padded != batch:
        out = out[:batch]
    return out


def init_params(key, input_size, hidden_layer_sizes, output_size, dtype=jnp.float32):
    """Deterministic init mimicking nn.Linear: U(-1/sqrt(fan_in), 1/sqrt(fan_in))."""
    sizes = [input_size] + list(hidden_layer_sizes) + [output_size]
    weights, biases = [], []
    for i in range(len(sizes) - 1):
        fan_in, fan_out = sizes[i], sizes[i + 1]
        key, kw, kb = jax.random.split(key, 3)
        bound = 1.0 / (fan_in ** 0.5)
        weights.append(jax.random.uniform(kw, (fan_out, fan_in), dtype, -bound, bound))
        biases.append(jax.random.uniform(kb, (fan_out,), dtype, -bound, bound))
    return weights, biases


def mlp_reference_f32(x, weights, biases):
    """Pure-JAX f32 reference matching module_fn (F.linear = x @ W.T + b)."""
    h = x
    for w, b in zip(weights[:-1], biases[:-1]):
        h = jnp.maximum(h @ w.T + b, 0.0)
    return h @ weights[-1].T + biases[-1]


def mlp_reference_packed(x, weights, biases, param_dtype=jnp.bfloat16):
    """Pure-JAX reference mirroring the kernel numerics: bf16 weights and bf16
    activations into each dot, f32 accumulation, f32 bias add / ReLU."""
    h = x
    last = len(weights) - 1
    for idx, (w, b) in enumerate(zip(weights, biases)):
        h = jnp.dot(h.astype(param_dtype), jnp.transpose(w).astype(param_dtype),
                    preferred_element_type=jnp.float32) + b.astype(jnp.float32)
        if idx != last:
            h = jnp.maximum(h, 0.0)
    return h


if __name__ == "__main__":
    hidden_layer_sizes = [50, 50, 50, 50, 50, 50, 50, 50]
    input_size = 1000
    output_size = 10
    batch = 8

    key = jax.random.PRNGKey(0)
    key, kx = jax.random.split(key)
    x = jax.random.normal(kx, (batch, input_size), jnp.float32)
    weights, biases = init_params(key, input_size, hidden_layer_sizes, output_size)

    # One-time packing (outside the per-call path). bf16 weight slabs by default;
    # pass param_dtype=jnp.float32 to keep full-precision weights.
    w0p, wslab, bslab = pack_params(weights, biases, param_dtype=jnp.bfloat16)

    out = mlp_forward(x, w0p, wslab, bslab, out_dim=output_size)
    out = jax.block_until_ready(out)
    assert out.shape == (batch, output_size), out.shape

    # Tight check against a reference with identical dtype handling (bf16 weights
    # and activations into the dots, f32 accumulation).
    ref_packed = mlp_reference_packed(x, weights, biases, param_dtype=jnp.bfloat16)
    assert jnp.allclose(out, ref_packed, atol=2e-3, rtol=2e-3), (
        float(jnp.max(jnp.abs(out - ref_packed))))

    # Loose sanity check against the full-f32 module_fn semantics (bf16 weight
    # quantization introduces ~1% relative error through 9 layers).
    ref_f32 = mlp_reference_f32(x, weights, biases)
    assert jnp.allclose(out, ref_f32, atol=1e-1, rtol=1e-1), (
        float(jnp.max(jnp.abs(out - ref_f32))))

    print("KERNEL_OK")
</pallas_src>

<mosaic_0001>
module attributes {stable_mosaic.version = 11 : i64} {
  func.func @mlp_kernel(%arg0: i32, %arg1: memref<8x1000xf32, #tpu.memory_space<vmem>>, %arg2: memref<1000x64xbf16, #tpu.memory_space<vmem>>, %arg3: memref<8x64x64xbf16, #tpu.memory_space<vmem>>, %arg4: memref<9x1x64xf32, #tpu.memory_space<vmem>>, %arg5: memref<8x10xf32, #tpu.memory_space<vmem>>) attributes {dimension_semantics = [#tpu.dimension_semantics<parallel>], iteration_bounds = array<i64: 1>, scalar_prefetch = 0 : i64, scratch_operands = 0 : i64, tpu.core_type = #tpu.core_type<tc>, window_params = [{transform_indices = @transform_0, window_bounds = array<i64: 8, 1000>}, {pipeline_mode = #tpu.pipeline_mode<synchronous>, transform_indices = @transform_1, window_bounds = array<i64: 1000, 64>}, {pipeline_mode = #tpu.pipeline_mode<synchronous>, transform_indices = @transform_2, window_bounds = array<i64: 8, 64, 64>}, {pipeline_mode = #tpu.pipeline_mode<synchronous>, transform_indices = @transform_3, window_bounds = array<i64: 9, 1, 64>}, {transform_indices = @transform_4, window_bounds = array<i64: 8, 10>}]} {
    %c0 = arith.constant 0 : index
    %c0_0 = arith.constant 0 : index
    %c0_1 = arith.constant 0 : index
    %0 = vector.load %arg4[%c0, %c0_0, %c0_1] : memref<9x1x64xf32, #tpu.memory_space<vmem>>, vector<9x1x64xf32>
    %c0_2 = arith.constant 0 : index
    %c0_3 = arith.constant 0 : index
    %1 = vector.load %arg1[%c0_2, %c0_3] : memref<8x1000xf32, #tpu.memory_space<vmem>>, vector<8x1000xf32>
    %2 = arith.truncf %1 : vector<8x1000xf32> to vector<8x1000xbf16>
    %c0_4 = arith.constant 0 : index
    %c0_5 = arith.constant 0 : index
    %3 = vector.load %arg2[%c0_4, %c0_5] : memref<1000x64xbf16, #tpu.memory_space<vmem>>, vector<1000x64xbf16>
    %cst = arith.constant dense<0.000000e+00> : vector<8x64xf32>
    %4 = tpu.matmul %2, %3, %cst {dimension_numbers = #tpu.dot_dimension_numbers<[1], [0], [0], [1], [0, 0, 1, 1], [], []>} : vector<8x1000xbf16>, vector<1000x64xbf16>, vector<8x64xf32> -> vector<8x64xf32>
    %5 = vector.extract_strided_slice %0 {offsets = [0, 0, 0], sizes = [1, 1, 64], strides = [1, 1, 1]} : vector<9x1x64xf32> to vector<1x1x64xf32>
    %6 = vector.shape_cast %5 : vector<1x1x64xf32> to vector<1x64xf32>
    %7 = vector.broadcast %6 : vector<1x64xf32> to vector<8x64xf32>
    %8 = arith.addf %4, %7 : vector<8x64xf32>
    %cst_6 = arith.constant 0.000000e+00 : f32
    %9 = vector.broadcast %cst_6 : f32 to vector<8x64xf32>
    %10 = arith.maximumf %8, %9 : vector<8x64xf32>
    %11 = arith.truncf %10 : vector<8x64xf32> to vector<8x64xbf16>
    %c0_7 = arith.constant 0 : index
    %c0_8 = arith.constant 0 : index
    %c0_9 = arith.constant 0 : index
    %12 = vector.load %arg3[%c0_7, %c0_8, %c0_9] : memref<8x64x64xbf16, #tpu.memory_space<vmem>>, vector<1x64x64xbf16>
    %13 = vector.shape_cast %12 : vector<1x64x64xbf16> to vector<64x64xbf16>
    %cst_10 = arith.constant dense<0.000000e+00> : vector<8x64xf32>
    %14 = tpu.matmul %11, %13, %cst_10 {dimension_numbers = #tpu.dot_dimension_numbers<[1], [0], [0], [1], [0, 0, 1, 1], [], []>} : vector<8x64xbf16>, vector<64x64xbf16>, vector<8x64xf32> -> vector<8x64xf32>
    %15 = vector.extract_strided_slice %0 {offsets = [1, 0, 0], sizes = [1, 1, 64], strides = [1, 1, 1]} : vector<9x1x64xf32> to vector<1x1x64xf32>
    %16 = vector.shape_cast %15 : vector<1x1x64xf32> to vector<1x64xf32>
    %17 = vector.broadcast %16 : vector<1x64xf32> to vector<8x64xf32>
    %18 = arith.addf %14, %17 : vector<8x64xf32>
    %cst_11 = arith.constant 0.000000e+00 : f32
    %19 = vector.broadcast %cst_11 : f32 to vector<8x64xf32>
    %20 = arith.maximumf %18, %19 : vector<8x64xf32>
    %21 = arith.truncf %20 : vector<8x64xf32> to vector<8x64xbf16>
    %c1 = arith.constant 1 : index
    %c0_12 = arith.constant 0 : index
    %c0_13 = arith.constant 0 : index
    %22 = vector.load %arg3[%c1, %c0_12, %c0_13] : memref<8x64x64xbf16, #tpu.memory_space<vmem>>, vector<1x64x64xbf16>
    %23 = vector.shape_cast %22 : vector<1x64x64xbf16> to vector<64x64xbf16>
    %cst_14 = arith.constant dense<0.000000e+00> : vector<8x64xf32>
    %24 = tpu.matmul %21, %23, %cst_14 {dimension_numbers = #tpu.dot_dimension_numbers<[1], [0], [0], [1], [0, 0, 1, 1], [], []>} : vector<8x64xbf16>, vector<64x64xbf16>, vector<8x64xf32> -> vector<8x64xf32>
    %25 = vector.extract_strided_slice %0 {offsets = [2, 0, 0], sizes = [1, 1, 64], strides = [1, 1, 1]} : vector<9x1x64xf32> to vector<1x1x64xf32>
    %26 = vector.shape_cast %25 : vector<1x1x64xf32> to vector<1x64xf32>
    %27 = vector.broadcast %26 : vector<1x64xf32> to vector<8x64xf32>
    %28 = arith.addf %24, %27 : vector<8x64xf32>
    %cst_15 = arith.constant 0.000000e+00 : f32
    %29 = vector.broadcast %cst_15 : f32 to vector<8x64xf32>
    %30 = arith.maximumf %28, %29 : vector<8x64xf32>
    %31 = arith.truncf %30 : vector<8x64xf32> to vector<8x64xbf16>
    %c2 = arith.constant 2 : index
    %c0_16 = arith.constant 0 : index
    %c0_17 = arith.constant 0 : index
    %32 = vector.load %arg3[%c2, %c0_16, %c0_17] : memref<8x64x64xbf16, #tpu.memory_space<vmem>>, vector<1x64x64xbf16>
    %33 = vector.shape_cast %32 : vector<1x64x64xbf16> to vector<64x64xbf16>
    %cst_18 = arith.constant dense<0.000000e+00> : vector<8x64xf32>
    %34 = tpu.matmul %31, %33, %cst_18 {dimension_numbers = #tpu.dot_dimension_numbers<[1], [0], [0], [1], [0, 0, 1, 1], [], []>} : vector<8x64xbf16>, vector<64x64xbf16>, vector<8x64xf32> -> vector<8x64xf32>
    %35 = vector.extract_strided_slice %0 {offsets = [3, 0, 0], sizes = [1, 1, 64], strides = [1, 1, 1]} : vector<9x1x64xf32> to vector<1x1x64xf32>
    %36 = vector.shape_cast %35 : vector<1x1x64xf32> to vector<1x64xf32>
    %37 = vector.broadcast %36 : vector<1x64xf32> to vector<8x64xf32>
    %38 = arith.addf %34, %37 : vector<8x64xf32>
    %cst_19 = arith.constant 0.000000e+00 : f32
    %39 = vector.broadcast %cst_19 : f32 to vector<8x64xf32>
    %40 = arith.maximumf %38, %39 : vector<8x64xf32>
    %41 = arith.truncf %40 : vector<8x64xf32> to vector<8x64xbf16>
    %c3 = arith.constant 3 : index
    %c0_20 = arith.constant 0 : index
    %c0_21 = arith.constant 0 : index
    %42 = vector.load %arg3[%c3, %c0_20, %c0_21] : memref<8x64x64xbf16, #tpu.memory_space<vmem>>, vector<1x64x64xbf16>
    %43 = vector.shape_cast %42 : vector<1x64x64xbf16> to vector<64x64xbf16>
    %cst_22 = arith.constant dense<0.000000e+00> : vector<8x64xf32>
    %44 = tpu.matmul %41, %43, %cst_22 {dimension_numbers = #tpu.dot_dimension_numbers<[1], [0], [0], [1], [0, 0, 1, 1], [], []>} : vector<8x64xbf16>, vector<64x64xbf16>, vector<8x64xf32> -> vector<8x64xf32>
    %45 = vector.extract_strided_slice %0 {offsets = [4, 0, 0], sizes = [1, 1, 64], strides = [1, 1, 1]} : vector<9x1x64xf32> to vector<1x1x64xf32>
    %46 = vector.shape_cast %45 : vector<1x1x64xf32> to vector<1x64xf32>
    %47 = vector.broadcast %46 : vector<1x64xf32> to vector<8x64xf32>
    %48 = arith.addf %44, %47 : vector<8x64xf32>
    %cst_23 = arith.constant 0.000000e+00 : f32
    %49 = vector.broadcast %cst_23 : f32 to vector<8x64xf32>
    %50 = arith.maximumf %48, %49 : vector<8x64xf32>
    %51 = arith.truncf %50 : vector<8x64xf32> to vector<8x64xbf16>
    %c4 = arith.constant 4 : index
    %c0_24 = arith.constant 0 : index
    %c0_25 = arith.constant 0 : index
    %52 = vector.load %arg3[%c4, %c0_24, %c0_25] : memref<8x64x64xbf16, #tpu.memory_space<vmem>>, vector<1x64x64xbf16>
    %53 = vector.shape_cast %52 : vector<1x64x64xbf16> to vector<64x64xbf16>
    %cst_26 = arith.constant dense<0.000000e+00> : vector<8x64xf32>
    %54 = tpu.matmul %51, %53, %cst_26 {dimension_numbers = #tpu.dot_dimension_numbers<[1], [0], [0], [1], [0, 0, 1, 1], [], []>} : vector<8x64xbf16>, vector<64x64xbf16>, vector<8x64xf32> -> vector<8x64xf32>
    %55 = vector.extract_strided_slice %0 {offsets = [5, 0, 0], sizes = [1, 1, 64], strides = [1, 1, 1]} : vector<9x1x64xf32> to vector<1x1x64xf32>
    %56 = vector.shape_cast %55 : vector<1x1x64xf32> to vector<1x64xf32>
    %57 = vector.broadcast %56 : vector<1x64xf32> to vector<8x64xf32>
    %58 = arith.addf %54, %57 : vector<8x64xf32>
    %cst_27 = arith.constant 0.000000e+00 : f32
    %59 = vector.broadcast %cst_27 : f32 to vector<8x64xf32>
    %60 = arith.maximumf %58, %59 : vector<8x64xf32>
    %61 = arith.truncf %60 : vector<8x64xf32> to vector<8x64xbf16>
    %c5 = arith.constant 5 : index
    %c0_28 = arith.constant 0 : index
    %c0_29 = arith.constant 0 : index
    %62 = vector.load %arg3[%c5, %c0_28, %c0_29] : memref<8x64x64xbf16, #tpu.memory_space<vmem>>, vector<1x64x64xbf16>
    %63 = vector.shape_cast %62 : vector<1x64x64xbf16> to vector<64x64xbf16>
    %cst_30 = arith.constant dense<0.000000e+00> : vector<8x64xf32>
    %64 = tpu.matmul %61, %63, %cst_30 {dimension_numbers = #tpu.dot_dimension_numbers<[1], [0], [0], [1], [0, 0, 1, 1], [], []>} : vector<8x64xbf16>, vector<64x64xbf16>, vector<8x64xf32> -> vector<8x64xf32>
    %65 = vector.extract_strided_slice %0 {offsets = [6, 0, 0], sizes = [1, 1, 64], strides = [1, 1, 1]} : vector<9x1x64xf32> to vector<1x1x64xf32>
    %66 = vector.shape_cast %65 : vector<1x1x64xf32> to vector<1x64xf32>
    %67 = vector.broadcast %66 : vector<1x64xf32> to vector<8x64xf32>
    %68 = arith.addf %64, %67 : vector<8x64xf32>
    %cst_31 = arith.constant 0.000000e+00 : f32
    %69 = vector.broadcast %cst_31 : f32 to vector<8x64xf32>
    %70 = arith.maximumf %68, %69 : vector<8x64xf32>
    %71 = arith.truncf %70 : vector<8x64xf32> to vector<8x64xbf16>
    %c6 = arith.constant 6 : index
    %c0_32 = arith.constant 0 : index
    %c0_33 = arith.constant 0 : index
    %72 = vector.load %arg3[%c6, %c0_32, %c0_33] : memref<8x64x64xbf16, #tpu.memory_space<vmem>>, vector<1x64x64xbf16>
    %73 = vector.shape_cast %72 : vector<1x64x64xbf16> to vector<64x64xbf16>
    %cst_34 = arith.constant dense<0.000000e+00> : vector<8x64xf32>
    %74 = tpu.matmul %71, %73, %cst_34 {dimension_numbers = #tpu.dot_dimension_numbers<[1], [0], [0], [1], [0, 0, 1, 1], [], []>} : vector<8x64xbf16>, vector<64x64xbf16>, vector<8x64xf32> -> vector<8x64xf32>
    %75 = vector.extract_strided_slice %0 {offsets = [7, 0, 0], sizes = [1, 1, 64], strides = [1, 1, 1]} : vector<9x1x64xf32> to vector<1x1x64xf32>
    %76 = vector.shape_cast %75 : vector<1x1x64xf32> to vector<1x64xf32>
    %77 = vector.broadcast %76 : vector<1x64xf32> to vector<8x64xf32>
    %78 = arith.addf %74, %77 : vector<8x64xf32>
    %cst_35 = arith.constant 0.000000e+00 : f32
    %79 = vector.broadcast %cst_35 : f32 to vector<8x64xf32>
    %80 = arith.maximumf %78, %79 : vector<8x64xf32>
    %81 = arith.truncf %80 : vector<8x64xf32> to vector<8x64xbf16>
    %c7 = arith.constant 7 : index
    %c0_36 = arith.constant 0 : index
    %c0_37 = arith.constant 0 : index
    %82 = vector.load %arg3[%c7, %c0_36, %c0_37] : memref<8x64x64xbf16, #tpu.memory_space<vmem>>, vector<1x64x64xbf16>
    %83 = vector.shape_cast %82 : vector<1x64x64xbf16> to vector<64x64xbf16>
    %cst_38 = arith.constant dense<0.000000e+00> : vector<8x64xf32>
    %84 = tpu.matmul %81, %83, %cst_38 {dimension_numbers = #tpu.dot_dimension_numbers<[1], [0], [0], [1], [0, 0, 1, 1], [], []>} : vector<8x64xbf16>, vector<64x64xbf16>, vector<8x64xf32> -> vector<8x64xf32>
    %85 = vector.extract_strided_slice %0 {offsets = [8, 0, 0], sizes = [1, 1, 64], strides = [1, 1, 1]} : vector<9x1x64xf32> to vector<1x1x64xf32>
    %86 = vector.shape_cast %85 : vector<1x1x64xf32> to vector<1x64xf32>
    %87 = vector.broadcast %86 : vector<1x64xf32> to vector<8x64xf32>
    %88 = arith.addf %84, %87 : vector<8x64xf32>
    %89 = vector.extract_strided_slice %88 {offsets = [0, 0], sizes = [8, 10], strides = [1, 1]} : vector<8x64xf32> to vector<8x10xf32>
    %c0_39 = arith.constant 0 : index
    %c0_40 = arith.constant 0 : index
    %90 = vector.load %arg5[%c0_39, %c0_40] : memref<8x10xf32, #tpu.memory_space<vmem>>, vector<8x10xf32>
    tpu.vector_store %arg5[%c0_39, %c0_40], %89 {strides = array<i32>} : memref<8x10xf32, #tpu.memory_space<vmem>>, vector<8x10xf32>,
    return
  }
  func.func @transform_0(%arg0: i32) -> (i32, i32) {
    %c0_i32 = arith.constant 0 : i32
    %c0_i32_0 = arith.constant 0 : i32
    return %arg0, %c0_i32 : i32, i32
  }
  func.func @transform_1(%arg0: i32) -> (i32, i32) {
    %c0_i32 = arith.constant 0 : i32
    %c0_i32_0 = arith.constant 0 : i32
    %c0_i32_1 = arith.constant 0 : i32
    return %c0_i32, %c0_i32_0 : i32, i32
  }
  func.func @transform_2(%arg0: i32) -> (i32, i32, i32) {
    %c0_i32 = arith.constant 0 : i32
    %c0_i32_0 = arith.constant 0 : i32
    %c0_i32_1 = arith.constant 0 : i32
    %c0_i32_2 = arith.constant 0 : i32
    return %c0_i32, %c0_i32_0, %c0_i32_1 : i32, i32, i32
  }
  func.func @transform_3(%arg0: i32) -> (i32, i32, i32) {
    %c0_i32 = arith.constant 0 : i32
    %c0_i32_0 = arith.constant 0 : i32
    %c0_i32_1 = arith.constant 0 : i32
    %c0_i32_2 = arith.constant 0 : i32
    return %c0_i32, %c0_i32_0, %c0_i32_1 : i32, i32, i32
  }
  func.func @transform_4(%arg0: i32) -> (i32, i32) {
    %c0_i32 = arith.constant 0 : i32
    %c0_i32_0 = arith.constant 0 : i32
    return %arg0, %c0_i32 : i32, i32
  }
}

</mosaic_0001>

<llo_original>
// kernel: mlp_forward.1
$region0: #{mlp_forward.1}
  #allocation0 [shape = 'u32[]', space=smem, size = 0x4, offset = 0x4, fixed_abs, tag = 'smem constant byte address 0x4 - core index']
  #allocation1 [shape = 'u32[144,128]{1,0:T(1,128)}', space=vmem, size = 0x12000, scoped, tag = 'internal scratch']
  %s0 = inlined_call_operand.vmem [shape: f32[8,1000], index: 0, kind: input, shape index: {}]
  %s1 = inlined_call_operand.vmem [shape: bf16[1000,64], index: 1, kind: input, shape index: {}]
  %s2 = inlined_call_operand.vmem [shape: bf16[8,64,64], index: 2, kind: input, shape index: {}]
  %s3 = inlined_call_operand.vmem [shape: f32[9,1,64], index: 3, kind: input, shape index: {}]
  %s4 = inlined_call_operand.hbm [shape: f32[8,10], index: 4, kind: output, shape index: {}]
  %s5 = sld [smem:[#allocation0]]
  $region26: #{mlp_forward.1} parent=0
    _
  %s7 = ssub.s32 1, %s5
  %s8 = scalar_select 0, %s7, %s5
  $region1: #{mlp_forward.1} parent=0
    #allocation2 [shape = 'u8[4096]{0}', space=vmem, size = 0x1000, scoped, tag = 'output window, operand 0, single buffered']
    #allocation3 [shape = 's32[1]{0}', space=sflag, size = 0x4, scoped, tag = 'scoped memory for mlp_forward.1']
    %9 = vsyncpa [#allocation3], 0
    // Predicated region
    $region2: #{mlp_forward.1} parent=1 // pred_check
      _
    $region3: #{mlp_forward.1} parent=1 // pred_check_branch
      %11 = sbr.rel (0) target = $region5
    $region4: #{mlp_forward.1} parent=1 // pred_region
      _
    $region5: #{mlp_forward.1} parent=1 // pred_fallthru
      _
    // Predicated region
    $region6: #{mlp_forward.1} parent=1 // pred_check
      _
    $region7: #{mlp_forward.1} parent=1 // pred_check_branch
      %13 = sbr.rel (0) target = $region9
    $region8: #{mlp_forward.1} parent=1 // pred_region
      _
    $region9: #{mlp_forward.1} parent=1 // pred_fallthru
      _
    // Predicated region
    $region10: #{mlp_forward.1} parent=1 // pred_check
      _
    $region11: #{mlp_forward.1} parent=1 // pred_check_branch
      %15 = sbr.rel (0) target = $region13
    $region12: #{mlp_forward.1} parent=1 // pred_region
      _
    $region13: #{mlp_forward.1} parent=1 // pred_fallthru
      _
    // Predicated region
    $region14: #{mlp_forward.1} parent=1 // pred_check
      _
    $region15: #{mlp_forward.1} parent=1 // pred_check_branch
      %17 = sbr.rel (0) target = $region17
    $region16: #{mlp_forward.1} parent=1 // pred_region
      _
    $region17: #{mlp_forward.1} parent=1 // pred_fallthru
      _
    %v19 = vld [vmem:[%s3] sm:$0x1]
    %v20 = vld [vmem:[%s3 + $0x1] sm:$0x1]
    %v21 = vld [vmem:[%s3 + $0x2] sm:$0x1]
    %v22 = vld [vmem:[%s3 + $0x3] sm:$0x1]
    %v23 = vld [vmem:[%s3 + $0x4] sm:$0x1]
    %v24 = vld [vmem:[%s3 + $0x5] sm:$0x1]
    %v25 = vld [vmem:[%s3 + $0x6] sm:$0x1]
    %v26 = vld [vmem:[%s3 + $0x7] sm:$0x1]
    %v27 = vld [vmem:[%s3 + $0x8] sm:$0x1]
    %v28 = vld [vmem:[%s0] sm:$0xff]
    %v29 = vld [vmem:[%s0 + $0x8] sm:$0xff]
    %v30 = vld [vmem:[%s0 + $0x10] sm:$0xff]
    %v31 = vld [vmem:[%s0 + $0x18] sm:$0xff]
    %v32 = vld [vmem:[%s0 + $0x20] sm:$0xff]
    %v33 = vld [vmem:[%s0 + $0x28] sm:$0xff]
    %v34 = vld [vmem:[%s0 + $0x30] sm:$0xff]
    %v35 = vld [vmem:[%s0 + $0x38] sm:$0xff]
    %v36 = vpack.c.bf16 %v28, %v28
    %v37 = vpack.c.bf16 %v29, %v29
    %v38 = vpack.c.bf16 %v30, %v30
    %v39 = vpack.c.bf16 %v31, %v31
    %v40 = vpack.c.bf16 %v32, %v32
    %v41 = vpack.c.bf16 %v33, %v33
    %v42 = vpack.c.bf16 %v34, %v34
    %v43 = vpack.c.bf16 %v35, %v35
    %v44 = vld [vmem:[%s1] sm:$0xf]
    %v45 = vld [vmem:[%s1 + $0x4] sm:$0xf]
    %v46 = vld [vmem:[%s1 + $0x8] sm:$0xf]
    %v47 = vld [vmem:[%s1 + $0xc] sm:$0xf]
    %v48 = vld [vmem:[%s1 + $0x10] sm:$0xf]
    %v49 = vld [vmem:[%s1 + $0x14] sm:$0xf]
    %v50 = vld [vmem:[%s1 + $0x18] sm:$0xf]
    %v51 = vld [vmem:[%s1 + $0x1c] sm:$0xf]
    %v52 = vld [vmem:[%s1 + $0x20] sm:$0xf]
    %v53 = vld [vmem:[%s1 + $0x24] sm:$0xf]
    %v54 = vld [vmem:[%s1 + $0x28] sm:$0xf]
    %v55 = vld [vmem:[%s1 + $0x2c] sm:$0xf]
    %v56 = vld [vmem:[%s1 + $0x30] sm:$0xf]
    %v57 = vld [vmem:[%s1 + $0x34] sm:$0xf]
    %v58 = vld [vmem:[%s1 + $0x38] sm:$0xf]
    %v59 = vld [vmem:[%s1 + $0x3c] sm:$0xf]
    %v60 = vld [vmem:[%s1 + $0x40] sm:$0xf]
    %v61 = vld [vmem:[%s1 + $0x44] sm:$0xf]
    %v62 = vld [vmem:[%s1 + $0x48] sm:$0xf]
    %v63 = vld [vmem:[%s1 + $0x4c] sm:$0xf]
    %v64 = vld [vmem:[%s1 + $0x50] sm:$0xf]
    %v65 = vld [vmem:[%s1 + $0x54] sm:$0xf]
    %v66 = vld [vmem:[%s1 + $0x58] sm:$0xf]
    %v67 = vld [vmem:[%s1 + $0x5c] sm:$0xf]
    %v68 = vld [vmem:[%s1 + $0x60] sm:$0xf]
    %v69 = vld [vmem:[%s1 + $0x64] sm:$0xf]
    %v70 = vld [vmem:[%s1 + $0x68] sm:$0xf]
    %v71 = vld [vmem:[%s1 + $0x6c] sm:$0xf]
    %v72 = vld [vmem:[%s1 + $0x70] sm:$0xf]
    %v73 = vld [vmem:[%s1 + $0x74] sm:$0xf]
    %v74 = vld [vmem:[%s1 + $0x78] sm:$0xf]
    %v75 = vld [vmem:[%s1 + $0x7c] sm:$0xf]
    %v76 = vld [vmem:[%s1 + $0x80] sm:$0xf]
    %v77 = vld [vmem:[%s1 + $0x84] sm:$0xf]
    %v78 = vld [vmem:[%s1 + $0x88] sm:$0xf]
    %v79 = vld [vmem:[%s1 + $0x8c] sm:$0xf]
    %v80 = vld [vmem:[%s1 + $0x90] sm:$0xf]
    %v81 = vld [vmem:[%s1 + $0x94] sm:$0xf]
    %v82 = vld [vmem:[%s1 + $0x98] sm:$0xf]
    %v83 = vld [vmem:[%s1 + $0x9c] sm:$0xf]
    %v84 = vld [vmem:[%s1 + $0xa0] sm:$0xf]
    %v85 = vld [vmem:[%s1 + $0xa4] sm:$0xf]
    %v86 = vld [vmem:[%s1 + $0xa8] sm:$0xf]
    %v87 = vld [vmem:[%s1 + $0xac] sm:$0xf]
    %v88 = vld [vmem:[%s1 + $0xb0] sm:$0xf]
    %v89 = vld [vmem:[%s1 + $0xb4] sm:$0xf]
    %v90 = vld [vmem:[%s1 + $0xb8] sm:$0xf]
    %v91 = vld [vmem:[%s1 + $0xbc] sm:$0xf]
    %v92 = vld [vmem:[%s1 + $0xc0] sm:$0xf]
    %v93 = vld [vmem:[%s1 + $0xc4] sm:$0xf]
    %v94 = vld [vmem:[%s1 + $0xc8] sm:$0xf]
    %v95 = vld [vmem:[%s1 + $0xcc] sm:$0xf]
    %v96 = vld [vmem:[%s1 + $0xd0] sm:$0xf]
    %v97 = vld [vmem:[%s1 + $0xd4] sm:$0xf]
    %v98 = vld [vmem:[%s1 + $0xd8] sm:$0xf]
    %v99 = vld [vmem:[%s1 + $0xdc] sm:$0xf]
    %v100 = vld [vmem:[%s1 + $0xe0] sm:$0xf]
    %v101 = vld [vmem:[%s1 + $0xe4] sm:$0xf]
    %v102 = vld [vmem:[%s1 + $0xe8] sm:$0xf]
    %v103 = vld [vmem:[%s1 + $0xec] sm:$0xf]
    %v104 = vld [vmem:[%s1 + $0xf0] sm:$0xf]
    %v105 = vld [vmem:[%s1 + $0xf4] sm:$0xf]
    %v106 = vld [vmem:[%s1 + $0xf8] sm:$0xf]
    %v107 = vld [vmem:[%s1 + $0xfc] sm:$0xf]
    %v108 = vld [vmem:[%s1 + $0x100] sm:$0xf]
    %v109 = vld [vmem:[%s1 + $0x104] sm:$0xf]
    %v110 = vld [vmem:[%s1 + $0x108] sm:$0xf]
    %v111 = vld [vmem:[%s1 + $0x10c] sm:$0xf]
    %v112 = vld [vmem:[%s1 + $0x110] sm:$0xf]
    %v113 = vld [vmem:[%s1 + $0x114] sm:$0xf]
    %v114 = vld [vmem:[%s1 + $0x118] sm:$0xf]
    %v115 = vld [vmem:[%s1 + $0x11c] sm:$0xf]
    %v116 = vld [vmem:[%s1 + $0x120] sm:$0xf]
    %v117 = vld [vmem:[%s1 + $0x124] sm:$0xf]
    %v118 = vld [vmem:[%s1 + $0x128] sm:$0xf]
    %v119 = vld [vmem:[%s1 + $0x12c] sm:$0xf]
    %v120 = vld [vmem:[%s1 + $0x130] sm:$0xf]
    %v121 = vld [vmem:[%s1 + $0x134] sm:$0xf]
    %v122 = vld [vmem:[%s1 + $0x138] sm:$0xf]
    %v123 = vld [vmem:[%s1 + $0x13c] sm:$0xf]
    %v124 = vld [vmem:[%s1 + $0x140] sm:$0xf]
    %v125 = vld [vmem:[%s1 + $0x144] sm:$0xf]
    %v126 = vld [vmem:[%s1 + $0x148] sm:$0xf]
    %v127 = vld [vmem:[%s1 + $0x14c] sm:$0xf]
    %v128 = vld [vmem:[%s1 + $0x150] sm:$0xf]
    %v129 = vld [vmem:[%s1 + $0x154] sm:$0xf]
    %v130 = vld [vmem:[%s1 + $0x158] sm:$0xf]
    %v131 = vld [vmem:[%s1 + $0x15c] sm:$0xf]
    %v132 = vld [vmem:[%s1 + $0x160] sm:$0xf]
    %v133 = vld [vmem:[%s1 + $0x164] sm:$0xf]
    %v134 = vld [vmem:[%s1 + $0x168] sm:$0xf]
    %v135 = vld [vmem:[%s1 + $0x16c] sm:$0xf]
    %v136 = vld [vmem:[%s1 + $0x170] sm:$0xf]
    %v137 = vld [vmem:[%s1 + $0x174] sm:$0xf]
    %v138 = vld [vmem:[%s1 + $0x178] sm:$0xf]
    %v139 = vld [vmem:[%s1 + $0x17c] sm:$0xf]
    %v140 = vld [vmem:[%s1 + $0x180] sm:$0xf]
    %v141 = vld [vmem:[%s1 + $0x184] sm:$0xf]
    %v142 = vld [vmem:[%s1 + $0x188] sm:$0xf]
    %v143 = vld [vmem:[%s1 + $0x18c] sm:$0xf]
    %v144 = vld [vmem:[%s1 + $0x190] sm:$0xf]
    %v145 = vld [vmem:[%s1 + $0x194] sm:$0xf]
    %v146 = vld [vmem:[%s1 + $0x198] sm:$0xf]
    %v147 = vld [vmem:[%s1 + $0x19c] sm:$0xf]
    %v148 = vld [vmem:[%s1 + $0x1a0] sm:$0xf]
    %v149 = vld [vmem:[%s1 + $0x1a4] sm:$0xf]
    %v150 = vld [vmem:[%s1 + $0x1a8] sm:$0xf]
    %v151 = vld [vmem:[%s1 + $0x1ac] sm:$0xf]
    %v152 = vld [vmem:[%s1 + $0x1b0] sm:$0xf]
    %v153 = vld [vmem:[%s1 + $0x1b4] sm:$0xf]
    %v154 = vld [vmem:[%s1 + $0x1b8] sm:$0xf]
    %v155 = vld [vmem:[%s1 + $0x1bc] sm:$0xf]
    %v156 = vld [vmem:[%s1 + $0x1c0] sm:$0xf]
    %v157 = vld [vmem:[%s1 + $0x1c4] sm:$0xf]
    %v158 = vld [vmem:[%s1 + $0x1c8] sm:$0xf]
    %v159 = vld [vmem:[%s1 + $0x1cc] sm:$0xf]
    %v160 = vld [vmem:[%s1 + $0x1d0] sm:$0xf]
    %v161 = vld [vmem:[%s1 + $0x1d4] sm:$0xf]
    %v162 = vld [vmem:[%s1 + $0x1d8] sm:$0xf]
    %v163 = vld [vmem:[%s1 + $0x1dc] sm:$0xf]
    %v164 = vld [vmem:[%s1 + $0x1e0] sm:$0xf]
    %v165 = vld [vmem:[%s1 + $0x1e4] sm:$0xf]
    %v166 = vld [vmem:[%s1 + $0x1e8] sm:$0xf]
    %v167 = vld [vmem:[%s1 + $0x1ec] sm:$0xf]
    %v168 = vld [vmem:[%s1 + $0x1f0] sm:$0xf]
    %v170 = vlaneseq
    %v171 = vshrl.u32 %v170, 7
    %v172 = vsub.s32 0, %v171
    %v173 = vrot.slane %v19, %v172
    %v300 = vunpack.c.l.b16 %v44
    %v301 = vunpack.c.l.b16 %v45
    %v302 = vunpack.c.l.b16 %v46
    %v303 = vunpack.c.l.b16 %v47
    %v304 = vunpack.c.l.b16 %v48
    %v305 = vunpack.c.l.b16 %v49
    %v306 = vunpack.c.l.b16 %v50
    %v307 = vunpack.c.l.b16 %v51
    %v308 = vunpack.c.l.b16 %v52
    %v309 = vunpack.c.l.b16 %v53
    %v310 = vunpack.c.l.b16 %v54
    %v311 = vunpack.c.l.b16 %v55
    %v312 = vunpack.c.l.b16 %v56
    %v313 = vunpack.c.l.b16 %v57
    %v314 = vunpack.c.l.b16 %v58
    %v315 = vunpack.c.l.b16 %v59
    %v316 = vunpack.c.l.b16 %v60
    %v317 = vunpack.c.l.b16 %v61
    %v318 = vunpack.c.l.b16 %v62
    %v319 = vunpack.c.l.b16 %v63
    %v320 = vunpack.c.l.b16 %v64
    %v321 = vunpack.c.l.b16 %v65
    %v322 = vunpack.c.l.b16 %v66
    %v323 = vunpack.c.l.b16 %v67
    %v324 = vunpack.c.l.b16 %v68
    %v325 = vunpack.c.l.b16 %v69
    %v326 = vunpack.c.l.b16 %v70
    %v327 = vunpack.c.l.b16 %v71
    %v328 = vunpack.c.l.b16 %v72
    %v329 = vunpack.c.l.b16 %v73
    %v330 = vunpack.c.l.b16 %v74
    %v331 = vunpack.c.l.b16 %v75
    %v332 = vunpack.c.l.b16 %v76
    %v333 = vunpack.c.l.b16 %v77
    %v334 = vunpack.c.l.b16 %v78
    %v335 = vunpack.c.l.b16 %v79
    %v336 = vunpack.c.l.b16 %v80
    %v337 = vunpack.c.l.b16 %v81
    %v338 = vunpack.c.l.b16 %v82
    %v339 = vunpack.c.l.b16 %v83
    %v340 = vunpack.c.l.b16 %v84
    %v341 = vunpack.c.l.b16 %v85
    %v342 = vunpack.c.l.b16 %v86
    %v343 = vunpack.c.l.b16 %v87
    %v344 = vunpack.c.l.b16 %v88
    %v345 = vunpack.c.l.b16 %v89
    %v346 = vunpack.c.l.b16 %v90
    %v347 = vunpack.c.l.b16 %v91
    %v348 = vunpack.c.l.b16 %v92
    %v349 = vunpack.c.l.b16 %v93
    %v350 = vunpack.c.l.b16 %v94
    %v351 = vunpack.c.l.b16 %v95
    %v352 = vunpack.c.l.b16 %v96
    %v353 = vunpack.c.l.b16 %v97
    %v354 = vunpack.c.l.b16 %v98
    %v355 = vunpack.c.l.b16 %v99
    %v356 = vunpack.c.l.b16 %v100
    %v357 = vunpack.c.l.b16 %v101
    %v358 = vunpack.c.l.b16 %v102
    %v359 = vunpack.c.l.b16 %v103
    %v360 = vunpack.c.l.b16 %v104
    %v361 = vunpack.c.l.b16 %v105
    %v362 = vunpack.c.l.b16 %v106
    %v363 = vunpack.c.l.b16 %v107
    %v364 = vunpack.c.l.b16 %v108
    %v365 = vunpack.c.l.b16 %v109
    %v366 = vunpack.c.l.b16 %v110
    %v367 = vunpack.c.l.b16 %v111
    %v368 = vunpack.c.l.b16 %v112
    %v369 = vunpack.c.l.b16 %v113
    %v370 = vunpack.c.l.b16 %v114
    %v371 = vunpack.c.l.b16 %v115
    %v372 = vunpack.c.l.b16 %v116
    %v373 = vunpack.c.l.b16 %v117
    %v374 = vunpack.c.l.b16 %v118
    %v375 = vunpack.c.l.b16 %v119
    %v376 = vunpack.c.l.b16 %v120
    %v377 = vunpack.c.l.b16 %v121
    %v378 = vunpack.c.l.b16 %v122
    %v379 = vunpack.c.l.b16 %v123
    %v380 = vunpack.c.l.b16 %v124
    %v381 = vunpack.c.l.b16 %v125
    %v382 = vunpack.c.l.b16 %v126
    %v383 = vunpack.c.l.b16 %v127
    %v384 = vunpack.c.l.b16 %v128
    %v385 = vunpack.c.l.b16 %v129
    %v386 = vunpack.c.l.b16 %v130
    %v387 = vunpack.c.l.b16 %v131
    %v388 = vunpack.c.l.b16 %v132
    %v389 = vunpack.c.l.b16 %v133
    %v390 = vunpack.c.l.b16 %v134
    %v391 = vunpack.c.l.b16 %v135
    %v392 = vunpack.c.l.b16 %v136
    %v393 = vunpack.c.l.b16 %v137
    %v394 = vunpack.c.l.b16 %v138
    %v395 = vunpack.c.l.b16 %v139
    %v396 = vunpack.c.l.b16 %v140
    %v397 = vunpack.c.l.b16 %v141
    %v398 = vunpack.c.l.b16 %v142
    %v399 = vunpack.c.l.b16 %v143
    %v400 = vunpack.c.l.b16 %v144
    %v401 = vunpack.c.l.b16 %v145
    %v402 = vunpack.c.l.b16 %v146
    %v403 = vunpack.c.l.b16 %v147
    %v404 = vunpack.c.l.b16 %v148
    %v405 = vunpack.c.l.b16 %v149
    %v406 = vunpack.c.l.b16 %v150
    %v407 = vunpack.c.l.b16 %v151
    %v408 = vunpack.c.l.b16 %v152
    %v409 = vunpack.c.l.b16 %v153
    %v410 = vunpack.c.l.b16 %v154
    %v411 = vunpack.c.l.b16 %v155
    %v412 = vunpack.c.l.b16 %v156
    %v413 = vunpack.c.l.b16 %v157
    %v414 = vunpack.c.l.b16 %v158
    %v415 = vunpack.c.l.b16 %v159
    %v416 = vunpack.c.l.b16 %v160
    %v417 = vunpack.c.l.b16 %v161
    %v418 = vunpack.c.l.b16 %v162
    %v419 = vunpack.c.l.b16 %v163
    %v420 = vunpack.c.l.b16 %v164
    %v421 = vunpack.c.l.b16 %v165
    %v422 = vunpack.c.l.b16 %v166
    %v423 = vunpack.c.l.b16 %v167
    %v424 = vunpack.c.l.b16 %v168
    %v425 = vpack.c.b16 %v301, %v300
    %v426 = vpack.c.b16 %v303, %v302
    %v427 = vpack.c.b16 %v305, %v304
    %v428 = vpack.c.b16 %v307, %v306
    %v429 = vpack.c.b16 %v309, %v308
    %v430 = vpack.c.b16 %v311, %v310
    %v431 = vpack.c.b16 %v313, %v312
    %v432 = vpack.c.b16 %v315, %v314
    %v433 = vpack.c.b16 %v317, %v316
    %v434 = vpack.c.b16 %v319, %v318
    %v435 = vpack.c.b16 %v321, %v320
    %v436 = vpack.c.b16 %v323, %v322
    %v437 = vpack.c.b16 %v325, %v324
    %v438 = vpack.c.b16 %v327, %v326
    %v439 = vpack.c.b16 %v329, %v328
    %v440 = vpack.c.b16 %v331, %v330
    %v441 = vpack.c.b16 %v333, %v332
    %v442 = vpack.c.b16 %v335, %v334
    %v443 = vpack.c.b16 %v337, %v336
    %v444 = vpack.c.b16 %v339, %v338
    %v445 = vpack.c.b16 %v341, %v340
    %v446 = vpack.c.b16 %v343, %v342
    %v447 = vpack.c.b16 %v345, %v344
    %v448 = vpack.c.b16 %v347, %v346
    %v449 = vpack.c.b16 %v349, %v348
    %v450 = vpack.c.b16 %v351, %v350
    %v451 = vpack.c.b16 %v353, %v352
    %v452 = vpack.c.b16 %v355, %v354
    %v453 = vpack.c.b16 %v357, %v356
    %v454 = vpack.c.b16 %v359, %v358
    %v455 = vpack.c.b16 %v361, %v360
    %v456 = vpack.c.b16 %v363, %v362
    %v457 = vpack.c.b16 %v365, %v364
    %v458 = vpack.c.b16 %v367, %v366
    %v459 = vpack.c.b16 %v369, %v368
    %v460 = vpack.c.b16 %v371, %v370
    %v461 = vpack.c.b16 %v373, %v372
    %v462 = vpack.c.b16 %v375, %v374
    %v463 = vpack.c.b16 %v377, %v376
    %v464 = vpack.c.b16 %v379, %v378
    %v465 = vpack.c.b16 %v381, %v380
    %v466 = vpack.c.b16 %v383, %v382
    %v467 = vpack.c.b16 %v385, %v384
    %v468 = vpack.c.b16 %v387, %v386
    %v469 = vpack.c.b16 %v389, %v388
    %v470 = vpack.c.b16 %v391, %v390
    %v471 = vpack.c.b16 %v393, %v392
    %v472 = vpack.c.b16 %v395, %v394
    %v473 = vpack.c.b16 %v397, %v396
    %v474 = vpack.c.b16 %v399, %v398
    %v475 = vpack.c.b16 %v401, %v400
    %v476 = vpack.c.b16 %v403, %v402
    %v477 = vpack.c.b16 %v405, %v404
    %v478 = vpack.c.b16 %v407, %v406
    %v479 = vpack.c.b16 %v409, %v408
    %v480 = vpack.c.b16 %v411, %v410
    %v481 = vpack.c.b16 %v413, %v412
    %v482 = vpack.c.b16 %v415, %v414
    %v483 = vpack.c.b16 %v417, %v416
    %v484 = vpack.c.b16 %v419, %v418
    %v485 = vpack.c.b16 %v421, %v420
    %v486 = vpack.c.b16 %v423, %v422
    %v487 = vpack.c.b16 %v424, %v424
    %vm550 = vcmask 850944
    %v552 = vsel %vm550, %v43, 0
    %vm554 = vcmask 1043456
    %v556 = vsel %vm554, %v487, 0
    %558 = vmatprep.subr.bf16.mxu0 0
    %559 = vmatpush1.bf16.msra.mxu0 %v432
    %560 = vmatprep.subr.bf16.mxu0 0
    %561 = vmatpush1.bf16.msra.mxu0 %v431
    %562 = vmatprep.subr.bf16.mxu0 0
    %563 = vmatpush1.bf16.msra.mxu0 %v430
    %564 = vmatprep.subr.bf16.mxu0 0
    %565 = vmatpush1.bf16.msra.mxu0 %v429
    %566 = vmatprep.subr.bf16.mxu0 0
    %567 = vmatpush1.bf16.msra.mxu0 %v428
    %568 = vmatprep.subr.bf16.mxu0 0
    %569 = vmatpush1.bf16.msra.mxu0 %v427
    %570 = vmatprep.subr.bf16.mxu0 0
    %571 = vmatpush1.bf16.msra.mxu0 %v426
    %572 = vmatprep.subr.bf16.mxu0 0
    %573 = vmatpush1.bf16.msra.mxu0 %v425
    %574 = vmatprep.subr.bf16.mxu0 0
    %575 = vmatpush2.bf16.msra.mxu0 %v440
    %576 = vmatprep.subr.bf16.mxu0 0
    %577 = vmatpush2.bf16.msra.mxu0 %v439
    %578 = vmatprep.subr.bf16.mxu0 0
    %579 = vmatpush2.bf16.msra.mxu0 %v438
    %580 = vmatprep.subr.bf16.mxu0 0
    %581 = vmatpush2.bf16.msra.mxu0 %v437
    %582 = vmatprep.subr.bf16.mxu0 0
    %583 = vmatpush2.bf16.msra.mxu0 %v436
    %584 = vmatprep.subr.bf16.mxu0 0
    %585 = vmatpush2.bf16.msra.mxu0 %v435
    %586 = vmatprep.subr.bf16.mxu0 0
    %587 = vmatpush2.bf16.msra.mxu0 %v434
    %588 = vmatprep.subr.bf16.mxu0 0
    %589 = vmatpush2.bf16.msra.mxu0 %v433
    %590 = vmatprep.mubr.bf16.mxu0 %v37
    %591 = vmatmul.mubr.bf16.gmra.mxu0 %v36
    %v592 = vpop.f32.mrf.mxu0
    %v593 = vadd.f32 %v173, %v592
    %v594 = vpop.f32.mrf.mxu0
    %v595 = vpop.f32.mrf.mxu0
    %v596 = vpop.f32.mrf.mxu0
    %597 = vdwg.mxu0
    %598 = vmatprep.subr.bf16.mxu0 0
    %599 = vmatpush1.bf16.msra.mxu0 %v448
    %600 = vmatprep.subr.bf16.mxu0 0
    %601 = vmatpush1.bf16.msra.mxu0 %v447
    %602 = vmatprep.subr.bf16.mxu0 0
    %603 = vmatpush1.bf16.msra.mxu0 %v446
    %604 = vmatprep.subr.bf16.mxu0 0
    %605 = vmatpush1.bf16.msra.mxu0 %v445
    %606 = vmatprep.subr.bf16.mxu0 0
    %607 = vmatpush1.bf16.msra.mxu0 %v444
    %608 = vmatprep.subr.bf16.mxu0 0
    %609 = vmatpush1.bf16.msra.mxu0 %v443
    %610 = vmatprep.subr.bf16.mxu0 0
    %611 = vmatpush1.bf16.msra.mxu0 %v442
    %612 = vmatprep.subr.bf16.mxu0 0
    %613 = vmatpush1.bf16.msra.mxu0 %v441
    %614 = vmatprep.subr.bf16.mxu0 0
    %615 = vmatpush2.bf16.msra.mxu0 %v456
    %616 = vmatprep.subr.bf16.mxu0 0
    %617 = vmatpush2.bf16.msra.mxu0 %v455
    %618 = vmatprep.subr.bf16.mxu0 0
    %619 = vmatpush2.bf16.msra.mxu0 %v454
    %620 = vmatprep.subr.bf16.mxu0 0
    %621 = vmatpush2.bf16.msra.mxu0 %v453
    %622 = vmatprep.subr.bf16.mxu0 0
    %623 = vmatpush2.bf16.msra.mxu0 %v452
    %624 = vmatprep.subr.bf16.mxu0 0
    %625 = vmatpush2.bf16.msra.mxu0 %v451
    %626 = vmatprep.subr.bf16.mxu0 0
    %627 = vmatpush2.bf16.msra.mxu0 %v450
    %628 = vmatprep.subr.bf16.mxu0 0
    %629 = vmatpush2.bf16.msra.mxu0 %v449
    %630 = vmatprep.mubr.bf16.mxu0 %v39
    %631 = vmatmul.mubr.bf16.gmra.mxu0 %v38
    %v632 = vpop.f32.mrf.mxu0
    %v633 = vadd.f32 %v593, %v632
    %v634 = vpop.f32.mrf.mxu0
    %v635 = vpop.f32.mrf.mxu0
    %v636 = vpop.f32.mrf.mxu0
    %637 = vdwg.mxu0
    %638 = vmatprep.subr.bf16.mxu0 0
    %639 = vmatpush1.bf16.msra.mxu0 %v464
    %640 = vmatprep.subr.bf16.mxu0 0
    %641 = vmatpush1.bf16.msra.mxu0 %v463
    %642 = vmatprep.subr.bf16.mxu0 0
    %643 = vmatpush1.bf16.msra.mxu0 %v462
    %644 = vmatprep.subr.bf16.mxu0 0
    %645 = vmatpush1.bf16.msra.mxu0 %v461
    %646 = vmatprep.subr.bf16.mxu0 0
    %647 = vmatpush1.bf16.msra.mxu0 %v460
    %648 = vmatprep.subr.bf16.mxu0 0
    %649 = vmatpush1.bf16.msra.mxu0 %v459
    %650 = vmatprep.subr.bf16.mxu0 0
    %651 = vmatpush1.bf16.msra.mxu0 %v458
    %652 = vmatprep.subr.bf16.mxu0 0
    %653 = vmatpush1.bf16.msra.mxu0 %v457
    %654 = vmatprep.subr.bf16.mxu0 0
    %655 = vmatpush2.bf16.msra.mxu0 %v472
    %656 = vmatprep.subr.bf16.mxu0 0
    %657 = vmatpush2.bf16.msra.mxu0 %v471
    %658 = vmatprep.subr.bf16.mxu0 0
    %659 = vmatpush2.bf16.msra.mxu0 %v470
    %660 = vmatprep.subr.bf16.mxu0 0
    %661 = vmatpush2.bf16.msra.mxu0 %v469
    %662 = vmatprep.subr.bf16.mxu0 0
    %663 = vmatpush2.bf16.msra.mxu0 %v468
    %664 = vmatprep.subr.bf16.mxu0 0
    %665 = vmatpush2.bf16.msra.mxu0 %v467
    %666 = vmatprep.subr.bf16.mxu0 0
    %667 = vmatpush2.bf16.msra.mxu0 %v466
    %668 = vmatprep.subr.bf16.mxu0 0
    %669 = vmatpush2.bf16.msra.mxu0 %v465
    %670 = vmatprep.mubr.bf16.mxu0 %v41
    %671 = vmatmul.mubr.bf16.gmra.mxu0 %v40
    %v672 = vpop.f32.mrf.mxu0
    %v673 = vadd.f32 %v633, %v672
    %v674 = vpop.f32.mrf.mxu0
    %v675 = vpop.f32.mrf.mxu0
    %v676 = vpop.f32.mrf.mxu0
    %677 = vdwg.mxu0
    %678 = vmatprep.subr.bf16.mxu0 0
    %679 = vmatpush1.bf16.msra.mxu0 %v480
    %680 = vmatprep.subr.bf16.mxu0 0
    %681 = vmatpush1.bf16.msra.mxu0 %v479
    %682 = vmatprep.subr.bf16.mxu0 0
    %683 = vmatpush1.bf16.msra.mxu0 %v478
    %684 = vmatprep.subr.bf16.mxu0 0
    %685 = vmatpush1.bf16.msra.mxu0 %v477
    %686 = vmatprep.subr.bf16.mxu0 0
    %687 = vmatpush1.bf16.msra.mxu0 %v476
    %688 = vmatprep.subr.bf16.mxu0 0
    %689 = vmatpush1.bf16.msra.mxu0 %v475
    %690 = vmatprep.subr.bf16.mxu0 0
    %691 = vmatpush1.bf16.msra.mxu0 %v474
    %692 = vmatprep.subr.bf16.mxu0 0
    %693 = vmatpush1.bf16.msra.mxu0 %v473
    %694 = vmatprep.subr.bf16.mxu0 0
    %695 = vmatpush2.bf16.msra.mxu0 0
    %696 = vmatprep.subr.bf16.mxu0 0
    %697 = vmatpush2.bf16.msra.mxu0 %v556
    %698 = vmatprep.subr.bf16.mxu0 0
    %699 = vmatpush2.bf16.msra.mxu0 %v486
    %700 = vmatprep.subr.bf16.mxu0 0
    %701 = vmatpush2.bf16.msra.mxu0 %v485
    %702 = vmatprep.subr.bf16.mxu0 0
    %703 = vmatpush2.bf16.msra.mxu0 %v484
    %704 = vmatprep.subr.bf16.mxu0 0
    %705 = vmatpush2.bf16.msra.mxu0 %v483
    %706 = vmatprep.subr.bf16.mxu0 0
    %707 = vmatpush2.bf16.msra.mxu0 %v482
    %708 = vmatprep.subr.bf16.mxu0 0
    %709 = vmatpush2.bf16.msra.mxu0 %v481
    %710 = vmatprep.mubr.bf16.mxu0 %v552
    %711 = vmatmul.mubr.bf16.gmra.mxu0 %v42
    %v712 = vpop.f32.mrf.mxu0
    %v713 = vadd.f32 %v673, %v712
    %v714 = vpop.f32.mrf.mxu0
    %v715 = vpop.f32.mrf.mxu0
    %v716 = vpop.f32.mrf.mxu0
    %717 = vdwg.mxu0
    %v718 = vmax.f32 %v713, 0.0
    %v719 = vpack.c.bf16 %v718, %v718
    %v720 = vld [vmem:[%s2] sm:$0xf]
    %v721 = vld [vmem:[%s2 + $0x4] sm:$0xf]
    %v722 = vld [vmem:[%s2 + $0x8] sm:$0xf]
    %v723 = vld [vmem:[%s2 + $0xc] sm:$0xf]
    %v724 = vld [vmem:[%s2 + $0x10] sm:$0xf]
    %v725 = vld [vmem:[%s2 + $0x14] sm:$0xf]
    %v726 = vld [vmem:[%s2 + $0x18] sm:$0xf]
    %v727 = vld [vmem:[%s2 + $0x1c] sm:$0xf]
    %v729 = vlaneseq
    %v730 = vshrl.u32 %v729, 7
    %v731 = vsub.s32 0, %v730
    %v732 = vrot.slane %v20, %v731
    %v742 = vunpack.c.l.b16 %v720
    %v743 = vunpack.c.l.b16 %v721
    %v744 = vunpack.c.l.b16 %v722
    %v745 = vunpack.c.l.b16 %v723
    %v746 = vunpack.c.l.b16 %v724
    %v747 = vunpack.c.l.b16 %v725
    %v748 = vunpack.c.l.b16 %v726
    %v749 = vunpack.c.l.b16 %v727
    %v750 = vpack.c.b16 %v743, %v742
    %v751 = vpack.c.b16 %v745, %v744
    %v752 = vpack.c.b16 %v747, %v746
    %v753 = vpack.c.b16 %v749, %v748
    %vm758 = vcmask 523264
    %v760 = vsel %vm758, %v719, 0
    %762 = vmatprep.subr.bf16.mxu0 0
    %763 = vmatpush1.bf16.msra.mxu0 0
    %764 = vmatprep.subr.bf16.mxu0 0
    %765 = vmatpush1.bf16.msra.mxu0 0
    %766 = vmatprep.subr.bf16.mxu0 0
    %767 = vmatpush1.bf16.msra.mxu0 0
    %768 = vmatprep.subr.bf16.mxu0 0
    %769 = vmatpush1.bf16.msra.mxu0 0
    %770 = vmatprep.subr.bf16.mxu0 0
    %771 = vmatpush1.bf16.msra.mxu0 %v753
    %772 = vmatprep.subr.bf16.mxu0 0
    %773 = vmatpush1.bf16.msra.mxu0 %v752
    %774 = vmatprep.subr.bf16.mxu0 0
    %775 = vmatpush1.bf16.msra.mxu0 %v751
    %776 = vmatprep.subr.bf16.mxu0 0
    %777 = vmatpush1.bf16.msra.mxu0 %v750
    %778 = vmatprep.subr.bf16.mxu0 0
    %779 = vmatpush2.bf16.msra.mxu0 0
    %780 = vmatprep.subr.bf16.mxu0 0
    %781 = vmatpush2.bf16.msra.mxu0 0
    %782 = vmatprep.subr.bf16.mxu0 0
    %783 = vmatpush2.bf16.msra.mxu0 0
    %784 = vmatprep.subr.bf16.mxu0 0
    %785 = vmatpush2.bf16.msra.mxu0 0
    %786 = vmatprep.subr.bf16.mxu0 0
    %787 = vmatpush2.bf16.msra.mxu0 0
    %788 = vmatprep.subr.bf16.mxu0 0
    %789 = vmatpush2.bf16.msra.mxu0 0
    %790 = vmatprep.subr.bf16.mxu0 0
    %791 = vmatpush2.bf16.msra.mxu0 0
    %792 = vmatprep.subr.bf16.mxu0 0
    %793 = vmatpush2.bf16.msra.mxu0 0
    %794 = vmatprep.mubr.bf16.mxu0 0
    %795 = vmatmul.mubr.bf16.gmra.mxu0 %v760
    %v796 = vpop.f32.mrf.mxu0
    %v797 = vadd.f32 %v732, %v796
    %v798 = vpop.f32.mrf.mxu0
    %v799 = vpop.f32.mrf.mxu0
    %v800 = vpop.f32.mrf.mxu0
    %801 = vdwg.mxu0
    %v802 = vmax.f32 %v797, 0.0
    %v803 = vpack.c.bf16 %v802, %v802
    %s804 = scalar_lea.vmem %s2, 32
    %v805 = vld [vmem:[%s804] sm:$0xf]
    %v806 = vld [vmem:[%s804 + $0x4] sm:$0xf]
    %v807 = vld [vmem:[%s804 + $0x8] sm:$0xf]
    %v808 = vld [vmem:[%s804 + $0xc] sm:$0xf]
    %v809 = vld [vmem:[%s804 + $0x10] sm:$0xf]
    %v810 = vld [vmem:[%s804 + $0x14] sm:$0xf]
    %v811 = vld [vmem:[%s804 + $0x18] sm:$0xf]
    %v812 = vld [vmem:[%s804 + $0x1c] sm:$0xf]
    %v814 = vlaneseq
    %v815 = vshrl.u32 %v814, 7
    %v816 = vsub.s32 0, %v815
    %v817 = vrot.slane %v21, %v816
    %v827 = vunpack.c.l.b16 %v805
    %v828 = vunpack.c.l.b16 %v806
    %v829 = vunpack.c.l.b16 %v807
    %v830 = vunpack.c.l.b16 %v808
    %v831 = vunpack.c.l.b16 %v809
    %v832 = vunpack.c.l.b16 %v810
    %v833 = vunpack.c.l.b16 %v811
    %v834 = vunpack.c.l.b16 %v812
    %v835 = vpack.c.b16 %v828, %v827
    %v836 = vpack.c.b16 %v830, %v829
    %v837 = vpack.c.b16 %v832, %v831
    %v838 = vpack.c.b16 %v834, %v833
    %v844 = vsel %vm758, %v803, 0
    %846 = vmatprep.subr.bf16.mxu0 0
    %847 = vmatpush1.bf16.msra.mxu0 0
    %848 = vmatprep.subr.bf16.mxu0 0
    %849 = vmatpush1.bf16.msra.mxu0 0
    %850 = vmatprep.subr.bf16.mxu0 0
    %851 = vmatpush1.bf16.msra.mxu0 0
    %852 = vmatprep.subr.bf16.mxu0 0
    %853 = vmatpush1.bf16.msra.mxu0 0
    %854 = vmatprep.subr.bf16.mxu0 0
    %855 = vmatpush1.bf16.msra.mxu0 %v838
    %856 = vmatprep.subr.bf16.mxu0 0
    %857 = vmatpush1.bf16.msra.mxu0 %v837
    %858 = vmatprep.subr.bf16.mxu0 0
    %859 = vmatpush1.bf16.msra.mxu0 %v836
    %860 = vmatprep.subr.bf16.mxu0 0
    %861 = vmatpush1.bf16.msra.mxu0 %v835
    %862 = vmatprep.subr.bf16.mxu0 0
    %863 = vmatpush2.bf16.msra.mxu0 0
    %864 = vmatprep.subr.bf16.mxu0 0
    %865 = vmatpush2.bf16.msra.mxu0 0
    %866 = vmatprep.subr.bf16.mxu0 0
    %867 = vmatpush2.bf16.msra.mxu0 0
    %868 = vmatprep.subr.bf16.mxu0 0
    %869 = vmatpush2.bf16.msra.mxu0 0
    %870 = vmatprep.subr.bf16.mxu0 0
    %871 = vmatpush2.bf16.msra.mxu0 0
    %872 = vmatprep.subr.bf16.mxu0 0
    %873 = vmatpush2.bf16.msra.mxu0 0
    %874 = vmatprep.subr.bf16.mxu0 0
    %875 = vmatpush2.bf16.msra.mxu0 0
    %876 = vmatprep.subr.bf16.mxu0 0
    %877 = vmatpush2.bf16.msra.mxu0 0
    %878 = vmatprep.mubr.bf16.mxu0 0
    %879 = vmatmul.mubr.bf16.gmra.mxu0 %v844
    %v880 = vpop.f32.mrf.mxu0
    %v881 = vadd.f32 %v817, %v880
    %v882 = vpop.f32.mrf.mxu0
    %v883 = vpop.f32.mrf.mxu0
    %v884 = vpop.f32.mrf.mxu0
    %885 = vdwg.mxu0
    %v886 = vmax.f32 %v881, 0.0
    %v887 = vpack.c.bf16 %v886, %v886
    %s888 = scalar_lea.vmem %s2, 64
    %v889 = vld [vmem:[%s888] sm:$0xf]
    %v890 = vld [vmem:[%s888 + $0x4] sm:$0xf]
    %v891 = vld [vmem:[%s888 + $0x8] sm:$0xf]
    %v892 = vld [vmem:[%s888 + $0xc] sm:$0xf]
    %v893 = vld [vmem:[%s888 + $0x10] sm:$0xf]
    %v894 = vld [vmem:[%s888 + $0x14] sm:$0xf]
    %v895 = vld [vmem:[%s888 + $0x18] sm:$0xf]
    %v896 = vld [vmem:[%s888 + $0x1c] sm:$0xf]
    %v898 = vlaneseq
    %v899 = vshrl.u32 %v898, 7
    %v900 = vsub.s32 0, %v899
    %v901 = vrot.slane %v22, %v900
    %v911 = vunpack.c.l.b16 %v889
    %v912 = vunpack.c.l.b16 %v890
    %v913 = vunpack.c.l.b16 %v891
    %v914 = vunpack.c.l.b16 %v892
    %v915 = vunpack.c.l.b16 %v893
    %v916 = vunpack.c.l.b16 %v894
    %v917 = vunpack.c.l.b16 %v895
    %v918 = vunpack.c.l.b16 %v896
    %v919 = vpack.c.b16 %v912, %v911
    %v920 = vpack.c.b16 %v914, %v913
    %v921 = vpack.c.b16 %v916, %v915
    %v922 = vpack.c.b16 %v918, %v917
    %v928 = vsel %vm758, %v887, 0
    %930 = vmatprep.subr.bf16.mxu0 0
    %931 = vmatpush1.bf16.msra.mxu0 0
    %932 = vmatprep.subr.bf16.mxu0 0
    %933 = vmatpush1.bf16.msra.mxu0 0
    %934 = vmatprep.subr.bf16.mxu0 0
    %935 = vmatpush1.bf16.msra.mxu0 0
    %936 = vmatprep.subr.bf16.mxu0 0
    %937 = vmatpush1.bf16.msra.mxu0 0
    %938 = vmatprep.subr.bf16.mxu0 0
    %939 = vmatpush1.bf16.msra.mxu0 %v922
    %940 = vmatprep.subr.bf16.mxu0 0
    %941 = vmatpush1.bf16.msra.mxu0 %v921
    %942 = vmatprep.subr.bf16.mxu0 0
    %943 = vmatpush1.bf16.msra.mxu0 %v920
    %944 = vmatprep.subr.bf16.mxu0 0
    %945 = vmatpush1.bf16.msra.mxu0 %v919
    %946 = vmatprep.subr.bf16.mxu0 0
    %947 = vmatpush2.bf16.msra.mxu0 0
    %948 = vmatprep.subr.bf16.mxu0 0
    %949 = vmatpush2.bf16.msra.mxu0 0
    %950 = vmatprep.subr.bf16.mxu0 0
    %951 = vmatpush2.bf16.msra.mxu0 0
    %952 = vmatprep.subr.bf16.mxu0 0
    %953 = vmatpush2.bf16.msra.mxu0 0
    %954 = vmatprep.subr.bf16.mxu0 0
    %955 = vmatpush2.bf16.msra.mxu0 0
    %956 = vmatprep.subr.bf16.mxu0 0
    %957 = vmatpush2.bf16.msra.mxu0 0
    %958 = vmatprep.subr.bf16.mxu0 0
    %959 = vmatpush2.bf16.msra.mxu0 0
    %960 = vmatprep.subr.bf16.mxu0 0
    %961 = vmatpush2.bf16.msra.mxu0 0
    %962 = vmatprep.mubr.bf16.mxu0 0
    %963 = vmatmul.mubr.bf16.gmra.mxu0 %v928
    %v964 = vpop.f32.mrf.mxu0
    %v965 = vadd.f32 %v901, %v964
    %v966 = vpop.f32.mrf.mxu0
    %v967 = vpop.f32.mrf.mxu0
    %v968 = vpop.f32.mrf.mxu0
    %969 = vdwg.mxu0
    %v970 = vmax.f32 %v965, 0.0
    %v971 = vpack.c.bf16 %v970, %v970
    %s972 = scalar_lea.vmem %s2, 96
    %v973 = vld [vmem:[%s972] sm:$0xf]
    %v974 = vld [vmem:[%s972 + $0x4] sm:$0xf]
    %v975 = vld [vmem:[%s972 + $0x8] sm:$0xf]
    %v976 = vld [vmem:[%s972 + $0xc] sm:$0xf]
    %v977 = vld [vmem:[%s972 + $0x10] sm:$0xf]
    %v978 = vld [vmem:[%s972 + $0x14] sm:$0xf]
    %v979 = vld [vmem:[%s972 + $0x18] sm:$0xf]
    %v980 = vld [vmem:[%s972 + $0x1c] sm:$0xf]
    %v982 = vlaneseq
    %v983 = vshrl.u32 %v982, 7
    %v984 = vsub.s32 0, %v983
    %v985 = vrot.slane %v23, %v984
    %v995 = vunpack.c.l.b16 %v973
    %v996 = vunpack.c.l.b16 %v974
    %v997 = vunpack.c.l.b16 %v975
    %v998 = vunpack.c.l.b16 %v976
    %v999 = vunpack.c.l.b16 %v977
    %v1000 = vunpack.c.l.b16 %v978
    %v1001 = vunpack.c.l.b16 %v979
    %v1002 = vunpack.c.l.b16 %v980
    %v1003 = vpack.c.b16 %v996, %v995
    %v1004 = vpack.c.b16 %v998, %v997
    %v1005 = vpack.c.b16 %v1000, %v999
    %v1006 = vpack.c.b16 %v1002, %v1001
    %v1012 = vsel %vm758, %v971, 0
    %1014 = vmatprep.subr.bf16.mxu0 0
    %1015 = vmatpush1.bf16.msra.mxu0 0
    %1016 = vmatprep.subr.bf16.mxu0 0
    %1017 = vmatpush1.bf16.msra.mxu0 0
    %1018 = vmatprep.subr.bf16.mxu0 0
    %1019 = vmatpush1.bf16.msra.mxu0 0
    %1020 = vmatprep.subr.bf16.mxu0 0
    %1021 = vmatpush1.bf16.msra.mxu0 0
    %1022 = vmatprep.subr.bf16.mxu0 0
    %1023 = vmatpush1.bf16.msra.mxu0 %v1006
    %1024 = vmatprep.subr.bf16.mxu0 0
    %1025 = vmatpush1.bf16.msra.mxu0 %v1005
    %1026 = vmatprep.subr.bf16.mxu0 0
    %1027 = vmatpush1.bf16.msra.mxu0 %v1004
    %1028 = vmatprep.subr.bf16.mxu0 0
    %1029 = vmatpush1.bf16.msra.mxu0 %v1003
    %1030 = vmatprep.subr.bf16.mxu0 0
    %1031 = vmatpush2.bf16.msra.mxu0 0
    %1032 = vmatprep.subr.bf16.mxu0 0
    %1033 = vmatpush2.bf16.msra.mxu0 0
    %1034 = vmatprep.subr.bf16.mxu0 0
    %1035 = vmatpush2.bf16.msra.mxu0 0
    %1036 = vmatprep.subr.bf16.mxu0 0
    %1037 = vmatpush2.bf16.msra.mxu0 0
    %1038 = vmatprep.subr.bf16.mxu0 0
    %1039 = vmatpush2.bf16.msra.mxu0 0
    %1040 = vmatprep.subr.bf16.mxu0 0
    %1041 = vmatpush2.bf16.msra.mxu0 0
    %1042 = vmatprep.subr.bf16.mxu0 0
    %1043 = vmatpush2.bf16.msra.mxu0 0
    %1044 = vmatprep.subr.bf16.mxu0 0
    %1045 = vmatpush2.bf16.msra.mxu0 0
    %1046 = vmatprep.mubr.bf16.mxu0 0
    %1047 = vmatmul.mubr.bf16.gmra.mxu0 %v1012
    %v1048 = vpop.f32.mrf.mxu0
    %v1049 = vadd.f32 %v985, %v1048
    %v1050 = vpop.f32.mrf.mxu0
    %v1051 = vpop.f32.mrf.mxu0
    %v1052 = vpop.f32.mrf.mxu0
    %1053 = vdwg.mxu0
    %v1054 = vmax.f32 %v1049, 0.0
    %v1055 = vpack.c.bf16 %v1054, %v1054
    %s1056 = scalar_lea.vmem %s2, 128
    %v1057 = vld [vmem:[%s1056] sm:$0xf]
    %v1058 = vld [vmem:[%s1056 + $0x4] sm:$0xf]
    %v1059 = vld [vmem:[%s1056 + $0x8] sm:$0xf]
    %v1060 = vld [vmem:[%s1056 + $0xc] sm:$0xf]
    %v1061 = vld [vmem:[%s1056 + $0x10] sm:$0xf]
    %v1062 = vld [vmem:[%s1056 + $0x14] sm:$0xf]
    %v1063 = vld [vmem:[%s1056 + $0x18] sm:$0xf]
    %v1064 = vld [vmem:[%s1056 + $0x1c] sm:$0xf]
    %v1066 = vlaneseq
    %v1067 = vshrl.u32 %v1066, 7
    %v1068 = vsub.s32 0, %v1067
    %v1069 = vrot.slane %v24, %v1068
    %v1079 = vunpack.c.l.b16 %v1057
    %v1080 = vunpack.c.l.b16 %v1058
    %v1081 = vunpack.c.l.b16 %v1059
    %v1082 = vunpack.c.l.b16 %v1060
    %v1083 = vunpack.c.l.b16 %v1061
    %v1084 = vunpack.c.l.b16 %v1062
    %v1085 = vunpack.c.l.b16 %v1063
    %v1086 = vunpack.c.l.b16 %v1064
    %v1087 = vpack.c.b16 %v1080, %v1079
    %v1088 = vpack.c.b16 %v1082, %v1081
    %v1089 = vpack.c.b16 %v1084, %v1083
    %v1090 = vpack.c.b16 %v1086, %v1085
    %v1096 = vsel %vm758, %v1055, 0
    %1098 = vmatprep.subr.bf16.mxu0 0
    %1099 = vmatpush1.bf16.msra.mxu0 0
    %1100 = vmatprep.subr.bf16.mxu0 0
    %1101 = vmatpush1.bf16.msra.mxu0 0
    %1102 = vmatprep.subr.bf16.mxu0 0
    %1103 = vmatpush1.bf16.msra.mxu0 0
    %1104 = vmatprep.subr.bf16.mxu0 0
    %1105 = vmatpush1.bf16.msra.mxu0 0
    %1106 = vmatprep.subr.bf16.mxu0 0
    %1107 = vmatpush1.bf16.msra.mxu0 %v1090
    %1108 = vmatprep.subr.bf16.mxu0 0
    %1109 = vmatpush1.bf16.msra.mxu0 %v1089
    %1110 = vmatprep.subr.bf16.mxu0 0
    %1111 = vmatpush1.bf16.msra.mxu0 %v1088
    %1112 = vmatprep.subr.bf16.mxu0 0
    %1113 = vmatpush1.bf16.msra.mxu0 %v1087
    %1114 = vmatprep.subr.bf16.mxu0 0
    %1115 = vmatpush2.bf16.msra.mxu0 0
    %1116 = vmatprep.subr.bf16.mxu0 0
    %1117 = vmatpush2.bf16.msra.mxu0 0
    %1118 = vmatprep.subr.bf16.mxu0 0
    %1119 = vmatpush2.bf16.msra.mxu0 0
    %1120 = vmatprep.subr.bf16.mxu0 0
    %1121 = vmatpush2.bf16.msra.mxu0 0
    %1122 = vmatprep.subr.bf16.mxu0 0
    %1123 = vmatpush2.bf16.msra.mxu0 0
    %1124 = vmatprep.subr.bf16.mxu0 0
    %1125 = vmatpush2.bf16.msra.mxu0 0
    %1126 = vmatprep.subr.bf16.mxu0 0
    %1127 = vmatpush2.bf16.msra.mxu0 0
    %1128 = vmatprep.subr.bf16.mxu0 0
    %1129 = vmatpush2.bf16.msra.mxu0 0
    %1130 = vmatprep.mubr.bf16.mxu0 0
    %1131 = vmatmul.mubr.bf16.gmra.mxu0 %v1096
    %v1132 = vpop.f32.mrf.mxu0
    %v1133 = vadd.f32 %v1069, %v1132
    %v1134 = vpop.f32.mrf.mxu0
    %v1135 = vpop.f32.mrf.mxu0
    %v1136 = vpop.f32.mrf.mxu0
    %1137 = vdwg.mxu0
    %v1138 = vmax.f32 %v1133, 0.0
    %v1139 = vpack.c.bf16 %v1138, %v1138
    %s1140 = scalar_lea.vmem %s2, 160
    %v1141 = vld [vmem:[%s1140] sm:$0xf]
    %v1142 = vld [vmem:[%s1140 + $0x4] sm:$0xf]
    %v1143 = vld [vmem:[%s1140 + $0x8] sm:$0xf]
    %v1144 = vld [vmem:[%s1140 + $0xc] sm:$0xf]
    %v1145 = vld [vmem:[%s1140 + $0x10] sm:$0xf]
    %v1146 = vld [vmem:[%s1140 + $0x14] sm:$0xf]
    %v1147 = vld [vmem:[%s1140 + $0x18] sm:$0xf]
    %v1148 = vld [vmem:[%s1140 + $0x1c] sm:$0xf]
    %v1150 = vlaneseq
    %v1151 = vshrl.u32 %v1150, 7
    %v1152 = vsub.s32 0, %v1151
    %v1153 = vrot.slane %v25, %v1152
    %v1163 = vunpack.c.l.b16 %v1141
    %v1164 = vunpack.c.l.b16 %v1142
    %v1165 = vunpack.c.l.b16 %v1143
    %v1166 = vunpack.c.l.b16 %v1144
    %v1167 = vunpack.c.l.b16 %v1145
    %v1168 = vunpack.c.l.b16 %v1146
    %v1169 = vunpack.c.l.b16 %v1147
    %v1170 = vunpack.c.l.b16 %v1148
    %v1171 = vpack.c.b16 %v1164, %v1163
    %v1172 = vpack.c.b16 %v1166, %v1165
    %v1173 = vpack.c.b16 %v1168, %v1167
    %v1174 = vpack.c.b16 %v1170, %v1169
    %v1180 = vsel %vm758, %v1139, 0
    %1182 = vmatprep.subr.bf16.mxu0 0
    %1183 = vmatpush1.bf16.msra.mxu0 0
    %1184 = vmatprep.subr.bf16.mxu0 0
    %1185 = vmatpush1.bf16.msra.mxu0 0
    %1186 = vmatprep.subr.bf16.mxu0 0
    %1187 = vmatpush1.bf16.msra.mxu0 0
    %1188 = vmatprep.subr.bf16.mxu0 0
    %1189 = vmatpush1.bf16.msra.mxu0 0
    %1190 = vmatprep.subr.bf16.mxu0 0
    %1191 = vmatpush1.bf16.msra.mxu0 %v1174
    %1192 = vmatprep.subr.bf16.mxu0 0
    %1193 = vmatpush1.bf16.msra.mxu0 %v1173
    %1194 = vmatprep.subr.bf16.mxu0 0
    %1195 = vmatpush1.bf16.msra.mxu0 %v1172
    %1196 = vmatprep.subr.bf16.mxu0 0
    %1197 = vmatpush1.bf16.msra.mxu0 %v1171
    %1198 = vmatprep.subr.bf16.mxu0 0
    %1199 = vmatpush2.bf16.msra.mxu0 0
    %1200 = vmatprep.subr.bf16.mxu0 0
    %1201 = vmatpush2.bf16.msra.mxu0 0
    %1202 = vmatprep.subr.bf16.mxu0 0
    %1203 = vmatpush2.bf16.msra.mxu0 0
    %1204 = vmatprep.subr.bf16.mxu0 0
    %1205 = vmatpush2.bf16.msra.mxu0 0
    %1206 = vmatprep.subr.bf16.mxu0 0
    %1207 = vmatpush2.bf16.msra.mxu0 0
    %1208 = vmatprep.subr.bf16.mxu0 0
    %1209 = vmatpush2.bf16.msra.mxu0 0
    %1210 = vmatprep.subr.bf16.mxu0 0
    %1211 = vmatpush2.bf16.msra.mxu0 0
    %1212 = vmatprep.subr.bf16.mxu0 0
    %1213 = vmatpush2.bf16.msra.mxu0 0
    %1214 = vmatprep.mubr.bf16.mxu0 0
    %1215 = vmatmul.mubr.bf16.gmra.mxu0 %v1180
    %v1216 = vpop.f32.mrf.mxu0
    %v1217 = vadd.f32 %v1153, %v1216
    %v1218 = vpop.f32.mrf.mxu0
    %v1219 = vpop.f32.mrf.mxu0
    %v1220 = vpop.f32.mrf.mxu0
    %1221 = vdwg.mxu0
    %v1222 = vmax.f32 %v1217, 0.0
    %v1223 = vpack.c.bf16 %v1222, %v1222
    %s1224 = scalar_lea.vmem %s2, 192
    %v1225 = vld [vmem:[%s1224] sm:$0xf]
    %v1226 = vld [vmem:[%s1224 + $0x4] sm:$0xf]
    %v1227 = vld [vmem:[%s1224 + $0x8] sm:$0xf]
    %v1228 = vld [vmem:[%s1224 + $0xc] sm:$0xf]
    %v1229 = vld [vmem:[%s1224 + $0x10] sm:$0xf]
    %v1230 = vld [vmem:[%s1224 + $0x14] sm:$0xf]
    %v1231 = vld [vmem:[%s1224 + $0x18] sm:$0xf]
    %v1232 = vld [vmem:[%s1224 + $0x1c] sm:$0xf]
    %v1234 = vlaneseq
    %v1235 = vshrl.u32 %v1234, 7
    %v1236 = vsub.s32 0, %v1235
    %v1237 = vrot.slane %v26, %v1236
    %v1247 = vunpack.c.l.b16 %v1225
    %v1248 = vunpack.c.l.b16 %v1226
    %v1249 = vunpack.c.l.b16 %v1227
    %v1250 = vunpack.c.l.b16 %v1228
    %v1251 = vunpack.c.l.b16 %v1229
    %v1252 = vunpack.c.l.b16 %v1230
    %v1253 = vunpack.c.l.b16 %v1231
    %v1254 = vunpack.c.l.b16 %v1232
    %v1255 = vpack.c.b16 %v1248, %v1247
    %v1256 = vpack.c.b16 %v1250, %v1249
    %v1257 = vpack.c.b16 %v1252, %v1251
    %v1258 = vpack.c.b16 %v1254, %v1253
    %v1264 = vsel %vm758, %v1223, 0
    %1266 = vmatprep.subr.bf16.mxu0 0
    %1267 = vmatpush1.bf16.msra.mxu0 0
    %1268 = vmatprep.subr.bf16.mxu0 0
    %1269 = vmatpush1.bf16.msra.mxu0 0
    %1270 = vmatprep.subr.bf16.mxu0 0
    %1271 = vmatpush1.bf16.msra.mxu0 0
    %1272 = vmatprep.subr.bf16.mxu0 0
    %1273 = vmatpush1.bf16.msra.mxu0 0
    %1274 = vmatprep.subr.bf16.mxu0 0
    %1275 = vmatpush1.bf16.msra.mxu0 %v1258
    %1276 = vmatprep.subr.bf16.mxu0 0
    %1277 = vmatpush1.bf16.msra.mxu0 %v1257
    %1278 = vmatprep.subr.bf16.mxu0 0
    %1279 = vmatpush1.bf16.msra.mxu0 %v1256
    %1280 = vmatprep.subr.bf16.mxu0 0
    %1281 = vmatpush1.bf16.msra.mxu0 %v1255
    %1282 = vmatprep.subr.bf16.mxu0 0
    %1283 = vmatpush2.bf16.msra.mxu0 0
    %1284 = vmatprep.subr.bf16.mxu0 0
    %1285 = vmatpush2.bf16.msra.mxu0 0
    %1286 = vmatprep.subr.bf16.mxu0 0
    %1287 = vmatpush2.bf16.msra.mxu0 0
    %1288 = vmatprep.subr.bf16.mxu0 0
    %1289 = vmatpush2.bf16.msra.mxu0 0
    %1290 = vmatprep.subr.bf16.mxu0 0
    %1291 = vmatpush2.bf16.msra.mxu0 0
    %1292 = vmatprep.subr.bf16.mxu0 0
    %1293 = vmatpush2.bf16.msra.mxu0 0
    %1294 = vmatprep.subr.bf16.mxu0 0
    %1295 = vmatpush2.bf16.msra.mxu0 0
    %1296 = vmatprep.subr.bf16.mxu0 0
    %1297 = vmatpush2.bf16.msra.mxu0 0
    %1298 = vmatprep.mubr.bf16.mxu0 0
    %1299 = vmatmul.mubr.bf16.gmra.mxu0 %v1264
    %v1300 = vpop.f32.mrf.mxu0
    %v1301 = vadd.f32 %v1237, %v1300
    %v1302 = vpop.f32.mrf.mxu0
    %v1303 = vpop.f32.mrf.mxu0
    %v1304 = vpop.f32.mrf.mxu0
    %1305 = vdwg.mxu0
    %v1306 = vmax.f32 %v1301, 0.0
    %v1307 = vpack.c.bf16 %v1306, %v1306
    %s1308 = scalar_lea.vmem %s2, 224
    %v1309 = vld [vmem:[%s1308] sm:$0xf]
    %v1310 = vld [vmem:[%s1308 + $0x4] sm:$0xf]
    %v1311 = vld [vmem:[%s1308 + $0x8] sm:$0xf]
    %v1312 = vld [vmem:[%s1308 + $0xc] sm:$0xf]
    %v1313 = vld [vmem:[%s1308 + $0x10] sm:$0xf]
    %v1314 = vld [vmem:[%s1308 + $0x14] sm:$0xf]
    %v1315 = vld [vmem:[%s1308 + $0x18] sm:$0xf]
    %v1316 = vld [vmem:[%s1308 + $0x1c] sm:$0xf]
    %v1318 = vlaneseq
    %v1319 = vshrl.u32 %v1318, 7
    %v1320 = vsub.s32 0, %v1319
    %v1321 = vrot.slane %v27, %v1320
    %v1331 = vunpack.c.l.b16 %v1309
    %v1332 = vunpack.c.l.b16 %v1310
    %v1333 = vunpack.c.l.b16 %v1311
    %v1334 = vunpack.c.l.b16 %v1312
    %v1335 = vunpack.c.l.b16 %v1313
    %v1336 = vunpack.c.l.b16 %v1314
    %v1337 = vunpack.c.l.b16 %v1315
    %v1338 = vunpack.c.l.b16 %v1316
    %v1339 = vpack.c.b16 %v1332, %v1331
    %v1340 = vpack.c.b16 %v1334, %v1333
    %v1341 = vpack.c.b16 %v1336, %v1335
    %v1342 = vpack.c.b16 %v1338, %v1337
    %v1348 = vsel %vm758, %v1307, 0
    %1350 = vmatprep.subr.bf16.mxu0 0
    %1351 = vmatpush1.bf16.msra.mxu0 0
    %1352 = vmatprep.subr.bf16.mxu0 0
    %1353 = vmatpush1.bf16.msra.mxu0 0
    %1354 = vmatprep.subr.bf16.mxu0 0
    %1355 = vmatpush1.bf16.msra.mxu0 0
    %1356 = vmatprep.subr.bf16.mxu0 0
    %1357 = vmatpush1.bf16.msra.mxu0 0
    %1358 = vmatprep.subr.bf16.mxu0 0
    %1359 = vmatpush1.bf16.msra.mxu0 %v1342
    %1360 = vmatprep.subr.bf16.mxu0 0
    %1361 = vmatpush1.bf16.msra.mxu0 %v1341
    %1362 = vmatprep.subr.bf16.mxu0 0
    %1363 = vmatpush1.bf16.msra.mxu0 %v1340
    %1364 = vmatprep.subr.bf16.mxu0 0
    %1365 = vmatpush1.bf16.msra.mxu0 %v1339
    %1366 = vmatprep.subr.bf16.mxu0 0
    %1367 = vmatpush2.bf16.msra.mxu0 0
    %1368 = vmatprep.subr.bf16.mxu0 0
    %1369 = vmatpush2.bf16.msra.mxu0 0
    %1370 = vmatprep.subr.bf16.mxu0 0
    %1371 = vmatpush2.bf16.msra.mxu0 0
    %1372 = vmatprep.subr.bf16.mxu0 0
    %1373 = vmatpush2.bf16.msra.mxu0 0
    %1374 = vmatprep.subr.bf16.mxu0 0
    %1375 = vmatpush2.bf16.msra.mxu0 0
    %1376 = vmatprep.subr.bf16.mxu0 0
    %1377 = vmatpush2.bf16.msra.mxu0 0
    %1378 = vmatprep.subr.bf16.mxu0 0
    %1379 = vmatpush2.bf16.msra.mxu0 0
    %1380 = vmatprep.subr.bf16.mxu0 0
    %1381 = vmatpush2.bf16.msra.mxu0 0
    %1382 = vmatprep.mubr.bf16.mxu0 0
    %1383 = vmatmul.mubr.bf16.gmra.mxu0 %v1348
    %v1384 = vpop.f32.mrf.mxu0
    %v1385 = vadd.f32 %v1321, %v1384
    %v1386 = vpop.f32.mrf.mxu0
    %v1387 = vpop.f32.mrf.mxu0
    %v1388 = vpop.f32.mrf.mxu0
    %1389 = vdwg.mxu0
    %vm1390 = vcmask 80896
    %1391 = vst.msk [vmem:[#allocation2] sm:$0xff] %vm1390, %v1385
    // Predicated region
    $region18: #{mlp_forward.1} parent=1 // pred_check
      _
    $region19: #{mlp_forward.1} parent=1 // pred_check_branch
      %1393 = sbr.rel (0) target = $region21
    $region20: #{mlp_forward.1} parent=1 // pred_region
      %s1395 = ssub.s32 128, 128
      %1396 = vsyncadd [#allocation3], %s1395
      %s1398 = sshll.u32 [#allocation2], 4
      %s1399 = int_to_ptr.vmem [resolvable:$true] %s1398
      %1401 = dma.vmem_to_hbm [thread:$0]  %s1399, 128, %s4, [#allocation3]
    $region21: #{mlp_forward.1} parent=1 // pred_fallthru
      _
    // Predicated region
    $region22: #{mlp_forward.1} parent=1 // pred_check
      _
    $region23: #{mlp_forward.1} parent=1 // pred_check_branch
      %1403 = sbr.rel (0) target = $region25
    $region24: #{mlp_forward.1} parent=1 // pred_region
      %1404 = dma.done [#allocation3], 128
    $region25: #{mlp_forward.1} parent=1 // pred_fallthru
      _
    %1405 = vsyncpa [#allocation3], 1

</llo_original>
